<compile_context>
chip_gen: v7x
topology: tpu7x:2x2x1
jax: 0.10.0
libtpu: 0.0.40
codegen_flags: <defaults>
</compile_context>

<pallas_src>
import math

import jax
import jax.numpy as jnp
from jax.experimental import pallas as pl
from jax.experimental.pallas import tpu as pltpu

_MIN_CHUNK_BYTES = 1 << 20   # don't split DMAs below ~1 MiB per descriptor
_MAX_CHUNKS = 8              # enough concurrent streams to saturate HBM


def _resolve_shape(numel, shape):
    """Resolve a single -1 entry like torch.Tensor.view does."""
    shape = list(shape)
    if -1 in shape:
        idx = shape.index(-1)
        known = 1
        for i, s in enumerate(shape):
            if i != idx:
                known *= s
        assert known > 0 and numel % known == 0, "view shape incompatible with numel"
        shape[idx] = numel // known
    assert math.prod(shape) == numel, "view shape incompatible with numel"
    return tuple(shape)


def _sublane_multiple(dtype):
    # Rows per (sublane, lane) tile: 8 for 4-byte, 16 for 2-byte, 32 for 1-byte.
    return max(8, 32 // jnp.dtype(dtype).itemsize)


def _plan_chunks(n_rows, bytes_per_row, align):
    """Static (start, size) chunks along axis 0; each chunk >= ~1 MiB."""
    total = n_rows * bytes_per_row
    if total < 2 * _MIN_CHUNK_BYTES or n_rows < 2 * align:
        return ((0, n_rows),)
    n_chunks = int(min(_MAX_CHUNKS, total // _MIN_CHUNK_BYTES, n_rows // align))
    rows_per = -(-n_rows // n_chunks)            # ceil
    rows_per = -(-rows_per // align) * align     # round up to alignment
    chunks = []
    start = 0
    while start < n_rows:
        size = min(rows_per, n_rows - start)
        chunks.append((start, size))
        start += size
    return tuple(chunks)


def _make_copy_kernel(chunks):
    def kernel(x_hbm, o_hbm, sems):
        # Start every DMA before waiting on any, so the chunks stream
        # concurrently on the DMA engines (the TensorCore only builds
        # descriptors here -- there is no compute at all).
        copies = []
        for i, (start, size) in enumerate(chunks):
            cp = pltpu.make_async_copy(
                x_hbm.at[pl.ds(start, size)],
                o_hbm.at[pl.ds(start, size)],
                sems.at[i],
            )
            cp.start()
            copies.append(cp)
        for cp in copies:
            cp.wait()
    return kernel


def _pallas_identity_copy(x):
    """One HBM read + one HBM write of `x` (same shape/dtype), via DMA only."""
    orig_shape = x.shape
    if x.ndim < 2:
        x = jnp.reshape(x, (1, max(1, x.size)))          # 2-D for DMA slicing
    elif x.ndim > 3:
        # Merge leading (major) dims; the minor two dims are untouched, so this
        # is a free bitcast under TPU tiled layouts and gives a long axis 0 to
        # chunk over.
        x = jnp.reshape(x, (-1,) + x.shape[-2:])

    itemsize = jnp.dtype(x.dtype).itemsize
    n_rows = x.shape[0]
    bytes_per_row = (x.size // n_rows) * itemsize
    # Chunk boundaries along axis 0.  For 2-D inputs axis 0 is the sublane
    # axis, so keep boundaries on dtype-aware sublane-tile multiples; for 3-D
    # inputs axis 0 sits above the tiled minor dims and any boundary is fine.
    align = _sublane_multiple(x.dtype) if x.ndim == 2 else 1
    chunks = _plan_chunks(n_rows, bytes_per_row, align)

    copied = pl.pallas_call(
        _make_copy_kernel(chunks),
        out_shape=jax.ShapeDtypeStruct(x.shape, x.dtype),
        in_specs=[pl.BlockSpec(memory_space=pl.ANY)],
        out_specs=pl.BlockSpec(memory_space=pl.ANY),
        scratch_shapes=[pltpu.SemaphoreType.DMA((len(chunks),))],
        cost_estimate=pl.CostEstimate(
            flops=0,
            transcendentals=0,
            bytes_accessed=2 * x.size * itemsize,
        ),
    )(x)
    return jnp.reshape(copied, orig_shape)


def pallas_view(x, shape, *, copy=True):
    """Equivalent of `View(shape)(x)` in PyTorch.

    With copy=True (default) the data pass runs inside a Pallas HBM->HBM DMA
    kernel and the reshape itself is free metadata.  copy=False skips the
    kernel entirely, since a contiguous view needs no data movement.
    """
    numel = x.size
    if numel == 0:
        return jnp.reshape(x, shape)
    out_shape = _resolve_shape(numel, shape)
    if not copy:
        return jnp.reshape(x, out_shape)
    # TODO(synk): PyTorch .view() aliases storage; functional JAX returns a new
    # array, so the DMA copy (or copy=False) is the closest equivalent.
    y = _pallas_identity_copy(x)
    return jnp.reshape(y, out_shape)


if __name__ == "__main__":
    key = jax.random.PRNGKey(0)

    # Usage matching the module (face keypoint head): View((batch, -1)) on a
    # small NCHW feature map.
    x = jax.random.normal(key, (2, 4, 16, 16), dtype=jnp.float32)
    y = jax.block_until_ready(pallas_view(x, (2, -1)))
    assert y.shape == (2, 1024) and y.dtype == x.dtype
    assert bool(jnp.all(y == jnp.reshape(x, (2, 1024))))

    # Packed dtype (bf16) path.
    xb = x.astype(jnp.bfloat16)
    yb = jax.block_until_ready(pallas_view(xb, (-1, 64)))
    assert yb.shape == (32, 64)
    assert bool(jnp.all(yb == jnp.reshape(xb, (32, 64))))

    # Minor dim not a multiple of 128: now a single clean DMA (no pad/slice).
    x2 = jax.random.normal(key, (8, 40), dtype=jnp.float32)
    y2 = jax.block_until_ready(pallas_view(x2, (-1,)))
    assert y2.shape == (320,)
    assert bool(jnp.all(y2 == jnp.reshape(x2, (320,))))

    # 2 MiB tensor exercises the multi-descriptor (chunked) DMA path.
    x3 = jax.random.normal(key, (16, 128, 256), dtype=jnp.float32)
    y3 = jax.block_until_ready(pallas_view(x3, (16, -1)))
    assert y3.shape == (16, 128 * 256)
    assert bool(jnp.all(y3 == jnp.reshape(x3, (16, 128 * 256))))

    # copy=False fast path (pure metadata view).
    y4 = jax.block_until_ready(pallas_view(x, (2, -1), copy=False))
    assert bool(jnp.all(y4 == jnp.reshape(x, (2, 1024))))

    print("KERNEL_OK")
</pallas_src>

<mosaic_0001>
module attributes {stable_mosaic.version = 11 : i64} {
  func.func @kernel(%arg0: memref<8x16x16xf32, #tpu.memory_space<any>>, %arg1: memref<8x16x16xf32, #tpu.memory_space<any>>, %arg2: memref<1x!tpu.dma_semaphore, #tpu.memory_space<semaphore_mem>>) attributes {dimension_semantics = [], scalar_prefetch = 0 : i64, scratch_operands = 1 : i64, tpu.core_type = #tpu.core_type<tc>} {
    %c0_i32 = arith.constant 0 : i32
    %c0_i32_0 = arith.constant 0 : i32
    %c0_i32_1 = arith.constant 0 : i32
    %c0_i32_2 = arith.constant 0 : i32
    %0 = tpu.memref_slice %arg0[%c0_i32_0, %c0_i32_1, %c0_i32_2] : memref<8x16x16xf32, #tpu.memory_space<any>> -> memref<8x16x16xf32, #tpu.memory_space<any>>
    %c0_i32_3 = arith.constant 0 : i32
    %c0_i32_4 = arith.constant 0 : i32
    %c0_i32_5 = arith.constant 0 : i32
    %1 = tpu.memref_slice %arg1[%c0_i32_3, %c0_i32_4, %c0_i32_5] : memref<8x16x16xf32, #tpu.memory_space<any>> -> memref<8x16x16xf32, #tpu.memory_space<any>>
    %2 = tpu.memref_slice %arg2[%c0_i32] : memref<1x!tpu.dma_semaphore, #tpu.memory_space<semaphore_mem>> -> memref<1x!tpu.dma_semaphore, #tpu.memory_space<semaphore_mem>>
    %3 = tpu.memref_squeeze %2 : memref<1x!tpu.dma_semaphore, #tpu.memory_space<semaphore_mem>> -> memref<!tpu.dma_semaphore, #tpu.memory_space<semaphore_mem>>
    tpu.enqueue_dma source(%0 : memref<8x16x16xf32, #tpu.memory_space<any>>) target(%1 : memref<8x16x16xf32, #tpu.memory_space<any>>) target_semaphore(%3 : memref<!tpu.dma_semaphore, #tpu.memory_space<semaphore_mem>>)
    %c0_i32_6 = arith.constant 0 : i32
    %c0_i32_7 = arith.constant 0 : i32
    %c0_i32_8 = arith.constant 0 : i32
    %c0_i32_9 = arith.constant 0 : i32
    %4 = tpu.memref_slice %arg0[%c0_i32_7, %c0_i32_8, %c0_i32_9] : memref<8x16x16xf32, #tpu.memory_space<any>> -> memref<8x16x16xf32, #tpu.memory_space<any>>
    %c0_i32_10 = arith.constant 0 : i32
    %c0_i32_11 = arith.constant 0 : i32
    %c0_i32_12 = arith.constant 0 : i32
    %5 = tpu.memref_slice %arg1[%c0_i32_10, %c0_i32_11, %c0_i32_12] : memref<8x16x16xf32, #tpu.memory_space<any>> -> memref<8x16x16xf32, #tpu.memory_space<any>>
    %6 = tpu.memref_slice %arg2[%c0_i32_6] : memref<1x!tpu.dma_semaphore, #tpu.memory_space<semaphore_mem>> -> memref<1x!tpu.dma_semaphore, #tpu.memory_space<semaphore_mem>>
    %7 = tpu.memref_squeeze %6 : memref<1x!tpu.dma_semaphore, #tpu.memory_space<semaphore_mem>> -> memref<!tpu.dma_semaphore, #tpu.memory_space<semaphore_mem>>
    tpu.wait_dma2 semaphore(%7 : memref<!tpu.dma_semaphore, #tpu.memory_space<semaphore_mem>>) src(%4 : memref<8x16x16xf32, #tpu.memory_space<any>>) dst(%5 : memref<8x16x16xf32, #tpu.memory_space<any>>)
    return
  }
}

</mosaic_0001>

<llo_original>
// kernel: tpu_custom_call.1
$region0: #{tpu_custom_call.1}
  #allocation0 [shape = 'u32[]', space=smem, size = 0x4, offset = 0x4, fixed_abs, tag = 'smem constant byte address 0x4 - core index']
  #allocation1 [shape = 'u32[144,128]{1,0:T(1,128)}', space=vmem, size = 0x12000, scoped, tag = 'internal scratch']
  #allocation2 [shape = 's32[1]{0}', space=sflag, size = 0x4, scoped, tag = 'scratch operand']
  #allocation3 [shape = 's32[]', space=sflag, size = 0x4, offset = 0, fixed_abs, tag = 'sflag constant byte address 0x0 - dummy sync flag']
  #allocation4 [shape = 'u32[0]{0}', space=smem, size = 0, offset = 0, fixed_abs, tag = 'smem constant byte address 0x0 - null']
  %s0 = inlined_call_operand.hbm [shape: f32[8,16,16], index: 0, kind: input, shape index: {}]
  %s1 = inlined_call_operand.hbm [shape: f32[8,16,16], index: 1, kind: output, shape index: {}]
  %s2 = sld [smem:[#allocation0]]
  $region2: #{tpu_custom_call.1} parent=0
    _
  %s4 = ssub.s32 1, %s2
  %s5 = scalar_select 0, %s4, %s2
  %s7 = sshll.u32 1, 14
  %s8 = sxor.u32 4294967295, %s7
  %s11 = sshll.u32 3, 24
  %s12 = sxor.u32 4294967295, %s11
  %s13 = sand.u32 0, %s12
  %s15 = sor.u32 %s13, 0
  %18 = dma.general %s0, 2048, %s1, [#allocation2], [#allocation3], [#allocation4], %s15, 0
  %s19 = smul.u32 8, 16
  %s20 = smul.u32 %s19, 1
  %s21 = sshll.u32 %s20, 4
  %22 = dma.done [#allocation2], %s21
  %23 = vsyncmov [#allocation2]
  %s24 = vpop.sfrf %23
  %p25 = scmp.eq.s32.totalorder %s24, 0
  %p26 = pneg %p25
  %28 = shalt.err (%p26)

</llo_original>
